<compile_context>
chip_gen: v7x
topology: tpu7x:2x2x1
jax: 0.10.0
libtpu: 0.0.40
codegen_flags: <defaults>
</compile_context>

<pallas_src>
import jax
import jax.numpy as jnp
from jax import lax
from jax.experimental import pallas as pl
from jax.experimental.pallas import tpu as pltpu


def _round_up(x, m):
    return ((x + m - 1) // m) * m


def _pad_rows(x, rows):
    """Zero-pad dim 0 of a 2D array up to `rows` (zero factor rows add 0 to sums)."""
    return jnp.pad(x, ((0, rows - x.shape[0]), (0, 0)))


def _vmem_params():
    """(working_set_budget_bytes, vmem_limit_bytes) per TPU generation."""
    try:
        kind = jax.devices()[0].device_kind.lower()
    except Exception:  # pragma: no cover - defensive
        kind = ""
    if "v2" in kind or "v3" in kind:          # 16 MiB VMEM
        return 8 * 2**20, 12 * 2**20
    if "v4" in kind or "v5" in kind or "v6" in kind:   # 128 MiB VMEM
        return 64 * 2**20, 96 * 2**20
    # v7x (64 MiB physical VMEM) and unknown chips: stay conservative.
    return 36 * 2**20, 48 * 2**20


def _choose_tile(n, bytes_per_col, tile_n, vmem_budget):
    """Largest lane tile (multiple of 128) <= tile_n that fits the budget."""
    k = max(1, min(max(tile_n, 128) // 128, _round_up(max(n, 1), 128) // 128))
    while k > 1 and bytes_per_col * (k * 128) > vmem_budget:
        k //= 2
    return k * 128


# ---------------------------------------------------------------------------
# Kernels.  Layout: factor dim on sublanes, the row dim N = batch*seq on lanes
# -> sublane reduction, lane-dense merged (2, tn) output (row 0 = ratings,
# row 1 = logits).
# ---------------------------------------------------------------------------

def _mf_stream_kernel(u_ref, it_ref, out_ref):
    # u_ref:  (F_pad,  tn)  gathered user factors
    # it_ref: (2F_pad, tn)  gathered [item_factors ; item_implicit_factors]
    f_pad = u_ref.shape[0]
    u = u_ref[...]
    # Item block consumed through zero-cost ref slices (F_pad is sublane
    # aligned), not by slicing a materialized (2F_pad, tn) value.
    out_ref[0:1, :] = jnp.sum(u * it_ref[0:f_pad, :], axis=0, keepdims=True)
    out_ref[1:2, :] = jnp.sum(u * it_ref[f_pad:, :], axis=0, keepdims=True)


def _mf_fused_kernel(uidx_ref, iidx_ref, ut_ref, it_ref, out_ref):
    # uidx_ref/iidx_ref: (1, tn) int32 row indices for this tile
    # ut_ref: (F_pad, 128)   VMEM-resident transposed user table
    # it_ref: (2F_pad, 128)  VMEM-resident transposed [item ; implicit] table
    f_pad = ut_ref.shape[0]
    tn = uidx_ref.shape[1]
    uidx = jnp.broadcast_to(uidx_ref[...], (f_pad, tn))
    iidx = jnp.broadcast_to(iidx_ref[...], (2 * f_pad, tn))
    mode = lax.GatherScatterMode.PROMISE_IN_BOUNDS
    u = jnp.take_along_axis(ut_ref[...], uidx, axis=1, mode=mode)      # (F_pad, tn)
    it = jnp.take_along_axis(it_ref[...], iidx, axis=1, mode=mode)     # (2F_pad, tn)
    out_ref[0:1, :] = jnp.sum(u * it[:f_pad, :], axis=0, keepdims=True)
    out_ref[1:2, :] = jnp.sum(u * it[f_pad:, :], axis=0, keepdims=True)


# ---------------------------------------------------------------------------
# Wrappers.
# ---------------------------------------------------------------------------

def _streaming_forward(user_idx, item_idx, uf_t, item_cat_t, n_total,
                       tile_n, vmem_budget, vmem_limit):
    """General path: XLA-side gather into (F, N) slabs, kernel streams them."""
    f_pad = uf_t.shape[0]
    # 3 factor streams + merged output, double buffered.
    bytes_per_col = (3 * f_pad + 2) * 4 * 2
    tn = _choose_tile(n_total, bytes_per_col, tile_n, vmem_budget)
    n_pad = _round_up(n_total, tn)
    pad = n_pad - n_total

    uidx = jnp.pad(user_idx, (0, pad))
    iidx = jnp.pad(item_idx, (0, pad))
    u_emb_t = jnp.take(uf_t, uidx, axis=1)           # (F_pad,  n_pad)
    it_emb_t = jnp.take(item_cat_t, iidx, axis=1)    # (2F_pad, n_pad)

    out = pl.pallas_call(
        _mf_stream_kernel,
        out_shape=jax.ShapeDtypeStruct((2, n_pad), jnp.float32),
        grid=(n_pad // tn,),
        in_specs=[
            pl.BlockSpec((f_pad, tn), lambda i: (0, i)),
            pl.BlockSpec((2 * f_pad, tn), lambda i: (0, i)),
        ],
        out_specs=pl.BlockSpec((2, tn), lambda i: (0, i)),
        compiler_params=pltpu.CompilerParams(
            dimension_semantics=("parallel",),
            vmem_limit_bytes=vmem_limit,
        ),
    )(u_emb_t, it_emb_t)
    return out[:, :n_total]


def _fused_forward(user_idx, item_idx, uf_t, item_cat_t, n_users, n_items,
                   n_total, tile_n, vmem_budget, vmem_limit):
    """Small-table path: tables resident in VMEM, gather fused into the kernel."""
    f_pad = uf_t.shape[0]
    # Per-column VMEM temps: broadcast indices (3*F_pad i32) + gathered factors
    # (3*F_pad f32) + product/reduce temps; streamed idx/out blocks are tiny.
    bytes_per_col = (8 * f_pad + 4) * 4
    tn = min(_choose_tile(n_total, bytes_per_col, tile_n, vmem_budget // 2), 8192)
    n_pad = _round_up(n_total, tn)
    pad = n_pad - n_total

    uidx = jnp.pad(user_idx, (0, pad)).reshape(1, n_pad)
    iidx = jnp.pad(item_idx, (0, pad)).reshape(1, n_pad)
    # Lane-pad the transposed tables to exactly 128 entries (vreg lane width).
    uf_vmem = jnp.pad(uf_t, ((0, 0), (0, 128 - n_users)))        # (F_pad,  128)
    it_vmem = jnp.pad(item_cat_t, ((0, 0), (0, 128 - n_items)))  # (2F_pad, 128)

    out = pl.pallas_call(
        _mf_fused_kernel,
        out_shape=jax.ShapeDtypeStruct((2, n_pad), jnp.float32),
        grid=(n_pad // tn,),
        in_specs=[
            pl.BlockSpec((1, tn), lambda i: (0, i)),
            pl.BlockSpec((1, tn), lambda i: (0, i)),
            # Constant block index -> tables stay resident, no re-DMA per step.
            pl.BlockSpec((f_pad, 128), lambda i: (0, 0)),
            pl.BlockSpec((2 * f_pad, 128), lambda i: (0, 0)),
        ],
        out_specs=pl.BlockSpec((2, tn), lambda i: (0, i)),
        compiler_params=pltpu.CompilerParams(
            dimension_semantics=("parallel",),
            vmem_limit_bytes=vmem_limit,
        ),
    )(uidx, iidx, uf_vmem, it_vmem)
    return out[:, :n_total]


def matrix_factorization_forward(user, item, user_factors, item_factors,
                                 item_implicit_factors, *, tile_n=16384):
    """Equivalent of MatrixFactorization.forward.

    user, item: int arrays of shape (B, S)
    returns (predicted_ratings, predicted_logits), each (B, S) float32.
    """
    B, S = user.shape
    n_users, n_factors = user_factors.shape
    n_items = item_factors.shape[0]
    n_total = B * S
    f_pad = _round_up(n_factors, 8)   # sublane-aligned factor boundary
    vmem_budget, vmem_limit = _vmem_params()

    user_idx = user.reshape(-1).astype(jnp.int32)
    item_idx = item.reshape(-1).astype(jnp.int32)

    # Transposed, factor-padded tables (zero factor rows contribute 0 to sums).
    uf_t = _pad_rows(user_factors.astype(jnp.float32).T, f_pad)         # (F_pad, n_users)
    item_cat_t = jnp.concatenate(
        [_pad_rows(item_factors.astype(jnp.float32).T, f_pad),
         _pad_rows(item_implicit_factors.astype(jnp.float32).T, f_pad)],
        axis=0)                                                          # (2F_pad, n_items)

    out = None
    if n_users <= 128 and n_items <= 128:
        # Fused in-kernel gather (tables VMEM resident).  Feature-probe: if the
        # Mosaic dynamic-gather lowering is unavailable, fall back silently.
        # (Only effective when called eagerly; under an outer jit the fallback
        # cannot intercept lowering errors.)
        try:
            out = _fused_forward(user_idx, item_idx, uf_t, item_cat_t,
                                 n_users, n_items, n_total, tile_n,
                                 vmem_budget, vmem_limit)
            out = jax.block_until_ready(out)
        except Exception:
            out = None
    if out is None:
        out = _streaming_forward(user_idx, item_idx, uf_t, item_cat_t,
                                 n_total, tile_n, vmem_budget, vmem_limit)

    ratings = out[0].reshape(B, S)
    logits = out[1].reshape(B, S)
    return ratings, logits


if __name__ == "__main__":
    # Small, deterministic problem: n_users=10, n_items=20, n_factors=32,
    # batch=2, seq=8 (user/item are (2, 8) index tensors).
    key = jax.random.PRNGKey(0)
    k_uf, k_if, k_iif, k_u, k_i = jax.random.split(key, 5)

    n_users, n_items, n_factors = 10, 20, 32
    B, S = 2, 8

    # torch.nn.Embedding default init ~ N(0, 1)
    user_factors = jax.random.normal(k_uf, (n_users, n_factors), jnp.float32)
    item_factors = jax.random.normal(k_if, (n_items, n_factors), jnp.float32)
    item_implicit_factors = jax.random.normal(
        k_iif, (n_items, n_factors), jnp.float32)

    user = jax.random.randint(k_u, (B, S), 0, n_users, jnp.int32)
    item = jax.random.randint(k_i, (B, S), 0, n_items, jnp.int32)

    ratings, logits = matrix_factorization_forward(
        user, item, user_factors, item_factors, item_implicit_factors)
    jax.block_until_ready((ratings, logits))

    # Reference check in plain JAX (same semantics as the PyTorch module).
    ref_ratings = (user_factors[user] * item_factors[item]).sum(2)
    ref_logits = (user_factors[user] * item_implicit_factors[item]).sum(2)
    assert ratings.shape == (B, S) and logits.shape == (B, S)
    assert jnp.allclose(ratings, ref_ratings, atol=1e-4, rtol=1e-4)
    assert jnp.allclose(logits, ref_logits, atol=1e-4, rtol=1e-4)

    print("KERNEL_OK")
</pallas_src>

<mosaic_0001>
module attributes {stable_mosaic.version = 11 : i64} {
  func.func @_mf_fused_kernel(%arg0: i32, %arg1: memref<1x128xi32, #tpu.memory_space<vmem>>, %arg2: memref<1x128xi32, #tpu.memory_space<vmem>>, %arg3: memref<32x128xf32, #tpu.memory_space<vmem>>, %arg4: memref<64x128xf32, #tpu.memory_space<vmem>>, %arg5: memref<2x128xf32, #tpu.memory_space<vmem>>) attributes {dimension_semantics = [#tpu.dimension_semantics<parallel>], iteration_bounds = array<i64: 1>, scalar_prefetch = 0 : i64, scratch_operands = 0 : i64, tpu.core_type = #tpu.core_type<tc>, window_params = [{transform_indices = @transform_0, window_bounds = array<i64: 1, 128>}, {transform_indices = @transform_1, window_bounds = array<i64: 1, 128>}, {pipeline_mode = #tpu.pipeline_mode<synchronous>, transform_indices = @transform_2, window_bounds = array<i64: 32, 128>}, {pipeline_mode = #tpu.pipeline_mode<synchronous>, transform_indices = @transform_3, window_bounds = array<i64: 64, 128>}, {transform_indices = @transform_4, window_bounds = array<i64: 2, 128>}]} {
    %c0 = arith.constant 0 : index
    %c0_0 = arith.constant 0 : index
    %0 = vector.load %arg1[%c0, %c0_0] : memref<1x128xi32, #tpu.memory_space<vmem>>, vector<1x128xi32>
    %1 = vector.shape_cast %0 : vector<1x128xi32> to vector<1x128xi32>
    %2 = vector.broadcast %1 : vector<1x128xi32> to vector<32x128xi32>
    %c0_1 = arith.constant 0 : index
    %c0_2 = arith.constant 0 : index
    %3 = vector.load %arg2[%c0_1, %c0_2] : memref<1x128xi32, #tpu.memory_space<vmem>>, vector<1x128xi32>
    %4 = vector.shape_cast %3 : vector<1x128xi32> to vector<1x128xi32>
    %5 = vector.broadcast %4 : vector<1x128xi32> to vector<64x128xi32>
    %c0_3 = arith.constant 0 : index
    %c0_4 = arith.constant 0 : index
    %6 = vector.load %arg3[%c0_3, %c0_4] : memref<32x128xf32, #tpu.memory_space<vmem>>, vector<32x128xf32>
    %c0_i32 = arith.constant 0 : i32
    %7 = vector.broadcast %c0_i32 : i32 to vector<32x128xi32>
    %8 = arith.cmpi slt, %2, %7 : vector<32x128xi32>
    %c128_i32 = arith.constant 128 : i32
    %9 = vector.broadcast %c128_i32 : i32 to vector<32x128xi32>
    %10 = arith.addi %2, %9 : vector<32x128xi32>
    %11 = arith.select %8, %10, %2 : vector<32x128xi1>, vector<32x128xi32>
    %12 = vector.shape_cast %11 : vector<32x128xi32> to vector<32x128x1xi32>
    %13 = vector.shape_cast %12 : vector<32x128x1xi32> to vector<32x128xi32>
    %14 = tpu.dynamic_gather %6[%13] in [1] : vector<32x128xf32>, vector<32x128xi32> -> vector<32x128xf32>
    %c0_5 = arith.constant 0 : index
    %c0_6 = arith.constant 0 : index
    %15 = vector.load %arg4[%c0_5, %c0_6] : memref<64x128xf32, #tpu.memory_space<vmem>>, vector<64x128xf32>
    %c0_i32_7 = arith.constant 0 : i32
    %16 = vector.broadcast %c0_i32_7 : i32 to vector<64x128xi32>
    %17 = arith.cmpi slt, %5, %16 : vector<64x128xi32>
    %c128_i32_8 = arith.constant 128 : i32
    %18 = vector.broadcast %c128_i32_8 : i32 to vector<64x128xi32>
    %19 = arith.addi %5, %18 : vector<64x128xi32>
    %20 = arith.select %17, %19, %5 : vector<64x128xi1>, vector<64x128xi32>
    %21 = vector.shape_cast %20 : vector<64x128xi32> to vector<64x128x1xi32>
    %22 = vector.shape_cast %21 : vector<64x128x1xi32> to vector<64x128xi32>
    %23 = tpu.dynamic_gather %15[%22] in [1] : vector<64x128xf32>, vector<64x128xi32> -> vector<64x128xf32>
    %24 = vector.extract_strided_slice %23 {offsets = [0, 0], sizes = [32, 128], strides = [1, 1]} : vector<64x128xf32> to vector<32x128xf32>
    %25 = arith.mulf %14, %24 : vector<32x128xf32>
    %cst = arith.constant dense<0.000000e+00> : vector<128xf32>
    %26 = vector.multi_reduction <add>, %25, %cst [0] : vector<32x128xf32> to vector<128xf32>
    %27 = vector.shape_cast %26 : vector<128xf32> to vector<1x128xf32>
    %c0_9 = arith.constant 0 : index
    %c0_10 = arith.constant 0 : index
    %28 = vector.load %arg5[%c0_9, %c0_10] : memref<2x128xf32, #tpu.memory_space<vmem>>, vector<1x128xf32>
    tpu.vector_store %arg5[%c0_9, %c0_10], %27 {strides = array<i32>} : memref<2x128xf32, #tpu.memory_space<vmem>>, vector<1x128xf32>,
    %29 = vector.extract_strided_slice %23 {offsets = [32, 0], sizes = [32, 128], strides = [1, 1]} : vector<64x128xf32> to vector<32x128xf32>
    %30 = arith.mulf %14, %29 : vector<32x128xf32>
    %cst_11 = arith.constant dense<0.000000e+00> : vector<128xf32>
    %31 = vector.multi_reduction <add>, %30, %cst_11 [0] : vector<32x128xf32> to vector<128xf32>
    %32 = vector.shape_cast %31 : vector<128xf32> to vector<1x128xf32>
    %c1 = arith.constant 1 : index
    %c0_12 = arith.constant 0 : index
    %33 = vector.load %arg5[%c1, %c0_12] : memref<2x128xf32, #tpu.memory_space<vmem>>, vector<1x128xf32>
    tpu.vector_store %arg5[%c1, %c0_12], %32 {strides = array<i32>} : memref<2x128xf32, #tpu.memory_space<vmem>>, vector<1x128xf32>,
    return
  }
  func.func @transform_0(%arg0: i32) -> (i32, i32) {
    %c0_i32 = arith.constant 0 : i32
    %c0_i32_0 = arith.constant 0 : i32
    return %c0_i32, %arg0 : i32, i32
  }
  func.func @transform_1(%arg0: i32) -> (i32, i32) {
    %c0_i32 = arith.constant 0 : i32
    %c0_i32_0 = arith.constant 0 : i32
    return %c0_i32, %arg0 : i32, i32
  }
  func.func @transform_2(%arg0: i32) -> (i32, i32) {
    %c0_i32 = arith.constant 0 : i32
    %c0_i32_0 = arith.constant 0 : i32
    %c0_i32_1 = arith.constant 0 : i32
    return %c0_i32, %c0_i32_0 : i32, i32
  }
  func.func @transform_3(%arg0: i32) -> (i32, i32) {
    %c0_i32 = arith.constant 0 : i32
    %c0_i32_0 = arith.constant 0 : i32
    %c0_i32_1 = arith.constant 0 : i32
    return %c0_i32, %c0_i32_0 : i32, i32
  }
  func.func @transform_4(%arg0: i32) -> (i32, i32) {
    %c0_i32 = arith.constant 0 : i32
    %c0_i32_0 = arith.constant 0 : i32
    return %c0_i32, %arg0 : i32, i32
  }
}

module attributes {stable_mosaic.version = 11 : i64} {
  func.func @_mf_stream_kernel(%arg0: i32, %arg1: memref<32x128xf32, #tpu.memory_space<vmem>>, %arg2: memref<64x128xf32, #tpu.memory_space<vmem>>, %arg3: memref<2x128xf32, #tpu.memory_space<vmem>>) attributes {dimension_semantics = [#tpu.dimension_semantics<parallel>], iteration_bounds = array<i64: 1>, scalar_prefetch = 0 : i64, scratch_operands = 0 : i64, tpu.core_type = #tpu.core_type<tc>, window_params = [{transform_indices = @transform_0, window_bounds = array<i64: 32, 128>}, {transform_indices = @transform_1, window_bounds = array<i64: 64, 128>}, {transform_indices = @transform_2, window_bounds = array<i64: 2, 128>}]} {
    %c0 = arith.constant 0 : index
    %c0_0 = arith.constant 0 : index
    %0 = vector.load %arg1[%c0, %c0_0] : memref<32x128xf32, #tpu.memory_space<vmem>>, vector<32x128xf32>
    %c0_1 = arith.constant 0 : index
    %c0_2 = arith.constant 0 : index
    %1 = vector.load %arg2[%c0_1, %c0_2] : memref<64x128xf32, #tpu.memory_space<vmem>>, vector<32x128xf32>
    %2 = arith.mulf %0, %1 : vector<32x128xf32>
    %cst = arith.constant dense<0.000000e+00> : vector<128xf32>
    %3 = vector.multi_reduction <add>, %2, %cst [0] : vector<32x128xf32> to vector<128xf32>
    %4 = vector.shape_cast %3 : vector<128xf32> to vector<1x128xf32>
    %c0_3 = arith.constant 0 : index
    %c0_4 = arith.constant 0 : index
    %5 = vector.load %arg3[%c0_3, %c0_4] : memref<2x128xf32, #tpu.memory_space<vmem>>, vector<1x128xf32>
    tpu.vector_store %arg3[%c0_3, %c0_4], %4 {strides = array<i32>} : memref<2x128xf32, #tpu.memory_space<vmem>>, vector<1x128xf32>,
    %c32 = arith.constant 32 : index
    %c0_5 = arith.constant 0 : index
    %6 = vector.load %arg2[%c32, %c0_5] : memref<64x128xf32, #tpu.memory_space<vmem>>, vector<32x128xf32>
    %7 = arith.mulf %0, %6 : vector<32x128xf32>
    %cst_6 = arith.constant dense<0.000000e+00> : vector<128xf32>
    %8 = vector.multi_reduction <add>, %7, %cst_6 [0] : vector<32x128xf32> to vector<128xf32>
    %9 = vector.shape_cast %8 : vector<128xf32> to vector<1x128xf32>
    %c1 = arith.constant 1 : index
    %c0_7 = arith.constant 0 : index
    %10 = vector.load %arg3[%c1, %c0_7] : memref<2x128xf32, #tpu.memory_space<vmem>>, vector<1x128xf32>
    tpu.vector_store %arg3[%c1, %c0_7], %9 {strides = array<i32>} : memref<2x128xf32, #tpu.memory_space<vmem>>, vector<1x128xf32>,
    return
  }
  func.func @transform_0(%arg0: i32) -> (i32, i32) {
    %c0_i32 = arith.constant 0 : i32
    %c0_i32_0 = arith.constant 0 : i32
    return %c0_i32, %arg0 : i32, i32
  }
  func.func @transform_1(%arg0: i32) -> (i32, i32) {
    %c0_i32 = arith.constant 0 : i32
    %c0_i32_0 = arith.constant 0 : i32
    return %c0_i32, %arg0 : i32, i32
  }
  func.func @transform_2(%arg0: i32) -> (i32, i32) {
    %c0_i32 = arith.constant 0 : i32
    %c0_i32_0 = arith.constant 0 : i32
    return %c0_i32, %arg0 : i32, i32
  }
}

</mosaic_0001>

<llo_original>
// kernel: tpu_custom_call.1
$region0: #{tpu_custom_call.1}
  #allocation0 [shape = 'u32[]', space=smem, size = 0x4, offset = 0x4, fixed_abs, tag = 'smem constant byte address 0x4 - core index']
  #allocation1 [shape = 'u32[144,128]{1,0:T(1,128)}', space=vmem, size = 0x12000, scoped, tag = 'internal scratch']
  %s0 = inlined_call_operand.hbm [shape: s32[1,128], index: 0, kind: input, shape index: {}]
  %s1 = inlined_call_operand.vmem [shape: s32[1,128], index: 1, kind: input, shape index: {}]
  %s2 = inlined_call_operand.hbm [shape: f32[32,128], index: 2, kind: input, shape index: {}]
  %s3 = inlined_call_operand.hbm [shape: f32[64,128], index: 3, kind: input, shape index: {}]
  %s4 = inlined_call_operand.hbm [shape: f32[2,128], index: 4, kind: output, shape index: {}]
  %s5 = sld [smem:[#allocation0]]
  $region38: #{tpu_custom_call.1} parent=0
    _
  %s7 = ssub.s32 1, %s5
  %s8 = scalar_select 0, %s7, %s5
  $region1: #{tpu_custom_call.1} parent=0
    #allocation2 [shape = 'u8[512]{0}', space=vmem, size = 0x400, scoped, tag = 'input window, operand 0, single buffered']
    #allocation3 [shape = 's32[1]{0}', space=sflag, size = 0x4, scoped, tag = 'scoped memory for tpu_custom_call.1']
    #allocation4 [shape = 's32[1]{0}', space=sflag, size = 0x4, scoped, tag = 'scoped memory for tpu_custom_call.1']
    #allocation5 [shape = 'u8[16384]{0}', space=vmem, size = 0x4000, scoped, tag = 'input window, operand 2, single buffered']
    #allocation6 [shape = 's32[1]{0}', space=sflag, size = 0x4, scoped, tag = 'scoped memory for tpu_custom_call.1']
    #allocation7 [shape = 'u8[32768]{0}', space=vmem, size = 0x8000, scoped, tag = 'input window, operand 3, single buffered']
    #allocation8 [shape = 'u8[1024]{0}', space=vmem, size = 0x400, scoped, tag = 'output window, operand 0, single buffered']
    %9 = vsyncpa [#allocation3], 0
    %10 = vsyncpa [#allocation6], 0
    %11 = vsyncpa [#allocation4], 0
    // Predicated region
    $region2: #{tpu_custom_call.1} parent=1 // pred_check
      _
    $region3: #{tpu_custom_call.1} parent=1 // pred_check_branch
      %13 = sbr.rel (0) target = $region5
    $region4: #{tpu_custom_call.1} parent=1 // pred_region
      %s15 = ssub.s32 16, 16
      %16 = vsyncadd [#allocation3], %s15
      %s18 = sshll.u32 [#allocation2], 4
      %s19 = int_to_ptr.vmem [resolvable:$true] %s18
      %21 = dma.hbm_to_vmem [thread:$0]  %s0, 16, %s19, [#allocation3]
    $region5: #{tpu_custom_call.1} parent=1 // pred_fallthru
      _
    // Predicated region
    $region6: #{tpu_custom_call.1} parent=1 // pred_check
      _
    $region7: #{tpu_custom_call.1} parent=1 // pred_check_branch
      %23 = sbr.rel (0) target = $region9
    $region8: #{tpu_custom_call.1} parent=1 // pred_region
      _
    $region9: #{tpu_custom_call.1} parent=1 // pred_fallthru
      _
    // Predicated region
    $region10: #{tpu_custom_call.1} parent=1 // pred_check
      _
    $region11: #{tpu_custom_call.1} parent=1 // pred_check_branch
      %25 = sbr.rel (0) target = $region13
    $region12: #{tpu_custom_call.1} parent=1 // pred_region
      %s27 = ssub.s32 512, 512
      %28 = vsyncadd [#allocation6], %s27
      %s29 = sshll.u32 [#allocation5], 4
      %s30 = int_to_ptr.vmem [resolvable:$true] %s29
      %35 = dma.hbm_to_vmem [thread:$0]  %s2, 512, %s30, [#allocation6], 128, 128, 8
    $region13: #{tpu_custom_call.1} parent=1 // pred_fallthru
      _
    // Predicated region
    $region14: #{tpu_custom_call.1} parent=1 // pred_check
      _
    $region15: #{tpu_custom_call.1} parent=1 // pred_check_branch
      %37 = sbr.rel (0) target = $region17
    $region16: #{tpu_custom_call.1} parent=1 // pred_region
      %s39 = ssub.s32 1024, 1024
      %40 = vsyncadd [#allocation6], %s39
      %s41 = sshll.u32 [#allocation7], 4
      %s42 = int_to_ptr.vmem [resolvable:$true] %s41
      %47 = dma.hbm_to_vmem [thread:$0]  %s3, 1024, %s42, [#allocation6], 128, 128, 8
    $region17: #{tpu_custom_call.1} parent=1 // pred_fallthru
      _
    // Predicated region
    $region18: #{tpu_custom_call.1} parent=1 // pred_check
      _
    $region19: #{tpu_custom_call.1} parent=1 // pred_check_branch
      %49 = sbr.rel (0) target = $region21
    $region20: #{tpu_custom_call.1} parent=1 // pred_region
      %50 = dma.done [#allocation3], 16
    $region21: #{tpu_custom_call.1} parent=1 // pred_fallthru
      _
    // Predicated region
    $region22: #{tpu_custom_call.1} parent=1 // pred_check
      _
    $region23: #{tpu_custom_call.1} parent=1 // pred_check_branch
      %52 = sbr.rel (0) target = $region25
    $region24: #{tpu_custom_call.1} parent=1 // pred_region
      %53 = dma.done [#allocation6], 512
    $region25: #{tpu_custom_call.1} parent=1 // pred_fallthru
      _
    // Predicated region
    $region26: #{tpu_custom_call.1} parent=1 // pred_check
      _
    $region27: #{tpu_custom_call.1} parent=1 // pred_check_branch
      %55 = sbr.rel (0) target = $region29
    $region28: #{tpu_custom_call.1} parent=1 // pred_region
      %56 = dma.done [#allocation6], 1024
    $region29: #{tpu_custom_call.1} parent=1 // pred_fallthru
      _
    %v57 = vld [vmem:[#allocation2] sm:$0x1]
    %v58 = vlaneseq
    %v59 = vshrl.u32 %v58, 7
    %v60 = vsub.s32 0, %v59
    %v61 = vrot.slane %v57, %v60
    %v62 = vld [vmem:[%s1] sm:$0x1]
    %v63 = vlaneseq
    %v64 = vshrl.u32 %v63, 7
    %v65 = vsub.s32 0, %v64
    %v66 = vrot.slane %v62, %v65
    %v67 = vld [vmem:[#allocation5] sm:$0xff]
    %v68 = vld [vmem:[#allocation5 + $0x8] sm:$0xff]
    %v69 = vld [vmem:[#allocation5 + $0x10] sm:$0xff]
    %v70 = vld [vmem:[#allocation5 + $0x18] sm:$0xff]
    %vm71 = vcmp.lt.s32.totalorder %v61, 0
    %v72 = vadd.s32 %v61, 128
    %v73 = vsel %vm71, %v72, %v61
    %74 = vset.pattern.permute.xlu0 %v73
    %75 = vperm.xlu0 %74, %v67
    %v76 = vpop.permute.xlu0 %75
    %77 = vset.pattern.permute.xlu0 %v73
    %78 = vperm.xlu0 %77, %v68
    %v79 = vpop.permute.xlu0 %78
    %80 = vset.pattern.permute.xlu0 %v73
    %81 = vperm.xlu0 %80, %v69
    %v82 = vpop.permute.xlu0 %81
    %83 = vset.pattern.permute.xlu0 %v73
    %84 = vperm.xlu0 %83, %v70
    %v85 = vpop.permute.xlu0 %84
    %v86 = vld [vmem:[#allocation7] sm:$0xff]
    %v87 = vld [vmem:[#allocation7 + $0x8] sm:$0xff]
    %v88 = vld [vmem:[#allocation7 + $0x10] sm:$0xff]
    %v89 = vld [vmem:[#allocation7 + $0x18] sm:$0xff]
    %v90 = vld [vmem:[#allocation7 + $0x20] sm:$0xff]
    %v91 = vld [vmem:[#allocation7 + $0x28] sm:$0xff]
    %v92 = vld [vmem:[#allocation7 + $0x30] sm:$0xff]
    %v93 = vld [vmem:[#allocation7 + $0x38] sm:$0xff]
    %vm94 = vcmp.lt.s32.totalorder %v66, 0
    %v95 = vadd.s32 %v66, 128
    %v96 = vsel %vm94, %v95, %v66
    %97 = vset.pattern.permute.xlu0 %v96
    %98 = vperm.xlu0 %97, %v86
    %v99 = vpop.permute.xlu0 %98
    %100 = vset.pattern.permute.xlu0 %v96
    %101 = vperm.xlu0 %100, %v87
    %v102 = vpop.permute.xlu0 %101
    %103 = vset.pattern.permute.xlu0 %v96
    %104 = vperm.xlu0 %103, %v88
    %v105 = vpop.permute.xlu0 %104
    %106 = vset.pattern.permute.xlu0 %v96
    %107 = vperm.xlu0 %106, %v89
    %v108 = vpop.permute.xlu0 %107
    %109 = vset.pattern.permute.xlu0 %v96
    %110 = vperm.xlu0 %109, %v90
    %v111 = vpop.permute.xlu0 %110
    %112 = vset.pattern.permute.xlu0 %v96
    %113 = vperm.xlu0 %112, %v91
    %v114 = vpop.permute.xlu0 %113
    %115 = vset.pattern.permute.xlu0 %v96
    %116 = vperm.xlu0 %115, %v92
    %v117 = vpop.permute.xlu0 %116
    %118 = vset.pattern.permute.xlu0 %v96
    %119 = vperm.xlu0 %118, %v93
    %v120 = vpop.permute.xlu0 %119
    %v121 = vmul.f32 %v76, %v99
    %v122 = vmul.f32 %v79, %v102
    %v123 = vmul.f32 %v82, %v105
    %v124 = vmul.f32 %v85, %v108
    %v125 = vadd.f32 %v121, %v122
    %v126 = vadd.f32 %v125, %v123
    %v127 = vadd.f32 %v126, %v124
    %v128 = vrot.slane %v127, 4
    %v129 = vadd.f32 %v127, %v128
    %v130 = vrot.slane %v129, 2
    %v131 = vadd.f32 %v129, %v130
    %v132 = vrot.slane %v131, 1
    %v133 = vadd.f32 %v131, %v132
    %134 = vst [vmem:[#allocation8] sm:$0x1] %v133
    %v135 = vmul.f32 %v76, %v111
    %v136 = vmul.f32 %v79, %v114
    %v137 = vmul.f32 %v82, %v117
    %v138 = vmul.f32 %v85, %v120
    %v139 = vadd.f32 %v135, %v136
    %v140 = vadd.f32 %v139, %v137
    %v141 = vadd.f32 %v140, %v138
    %v142 = vrot.slane %v141, 4
    %v143 = vadd.f32 %v141, %v142
    %v144 = vrot.slane %v143, 2
    %v145 = vadd.f32 %v143, %v144
    %v146 = vrot.slane %v145, 1
    %v147 = vadd.f32 %v145, %v146
    %148 = vst [vmem:[#allocation8 + $0x1] sm:$0x1] %v147
    // Predicated region
    $region30: #{tpu_custom_call.1} parent=1 // pred_check
      _
    $region31: #{tpu_custom_call.1} parent=1 // pred_check_branch
      %150 = sbr.rel (0) target = $region33
    $region32: #{tpu_custom_call.1} parent=1 // pred_region
      %s152 = ssub.s32 32, 32
      %153 = vsyncadd [#allocation4], %s152
      %s155 = sshll.u32 [#allocation8], 4
      %s156 = int_to_ptr.vmem [resolvable:$true] %s155
      %158 = dma.vmem_to_hbm [thread:$0]  %s156, 32, %s4, [#allocation4]
    $region33: #{tpu_custom_call.1} parent=1 // pred_fallthru
      _
    // Predicated region
    $region34: #{tpu_custom_call.1} parent=1 // pred_check
      _
    $region35: #{tpu_custom_call.1} parent=1 // pred_check_branch
      %160 = sbr.rel (0) target = $region37
    $region36: #{tpu_custom_call.1} parent=1 // pred_region
      %161 = dma.done [#allocation4], 32
    $region37: #{tpu_custom_call.1} parent=1 // pred_fallthru
      _
    %162 = vsyncpa [#allocation3], 1
    %163 = vsyncpa [#allocation6], 1
    %164 = vsyncpa [#allocation4], 1

// kernel: tpu_custom_call.1
$region0: #{tpu_custom_call.1}
  #allocation0 [shape = 'u32[]', space=smem, size = 0x4, offset = 0x4, fixed_abs, tag = 'smem constant byte address 0x4 - core index']
  #allocation1 [shape = 'u32[144,128]{1,0:T(1,128)}', space=vmem, size = 0x12000, scoped, tag = 'internal scratch']
  %s0 = inlined_call_operand.hbm [shape: f32[32,128], index: 0, kind: input, shape index: {}]
  %s1 = inlined_call_operand.hbm [shape: f32[64,128], index: 1, kind: input, shape index: {}]
  %s2 = inlined_call_operand.hbm [shape: f32[2,128], index: 2, kind: output, shape index: {}]
  %s3 = sld [smem:[#allocation0]]
  $region26: #{tpu_custom_call.1} parent=0
    _
  %s5 = ssub.s32 1, %s3
  %s6 = scalar_select 0, %s5, %s3
  $region1: #{tpu_custom_call.1} parent=0
    #allocation2 [shape = 'u8[16384]{0}', space=vmem, size = 0x4000, scoped, tag = 'input window, operand 0, single buffered']
    #allocation3 [shape = 's32[1]{0}', space=sflag, size = 0x4, scoped, tag = 'scoped memory for tpu_custom_call.1']
    #allocation4 [shape = 's32[1]{0}', space=sflag, size = 0x4, scoped, tag = 'scoped memory for tpu_custom_call.1']
    #allocation5 [shape = 'u8[32768]{0}', space=vmem, size = 0x8000, scoped, tag = 'input window, operand 1, single buffered']
    #allocation6 [shape = 's32[1]{0}', space=sflag, size = 0x4, scoped, tag = 'scoped memory for tpu_custom_call.1']
    #allocation7 [shape = 'u8[1024]{0}', space=vmem, size = 0x400, scoped, tag = 'output window, operand 0, single buffered']
    %7 = vsyncpa [#allocation3], 0
    %8 = vsyncpa [#allocation6], 0
    %9 = vsyncpa [#allocation4], 0
    // Predicated region
    $region2: #{tpu_custom_call.1} parent=1 // pred_check
      _
    $region3: #{tpu_custom_call.1} parent=1 // pred_check_branch
      %11 = sbr.rel (0) target = $region5
    $region4: #{tpu_custom_call.1} parent=1 // pred_region
      %s13 = ssub.s32 512, 512
      %14 = vsyncadd [#allocation3], %s13
      %s15 = sshll.u32 [#allocation2], 4
      %s16 = int_to_ptr.vmem [resolvable:$true] %s15
      %21 = dma.hbm_to_vmem [thread:$0]  %s0, 512, %s16, [#allocation3], 128, 128, 8
    $region5: #{tpu_custom_call.1} parent=1 // pred_fallthru
      _
    // Predicated region
    $region6: #{tpu_custom_call.1} parent=1 // pred_check
      _
    $region7: #{tpu_custom_call.1} parent=1 // pred_check_branch
      %23 = sbr.rel (0) target = $region9
    $region8: #{tpu_custom_call.1} parent=1 // pred_region
      %s25 = ssub.s32 1024, 1024
      %26 = vsyncadd [#allocation6], %s25
      %s27 = sshll.u32 [#allocation5], 4
      %s28 = int_to_ptr.vmem [resolvable:$true] %s27
      %33 = dma.hbm_to_vmem [thread:$0]  %s1, 1024, %s28, [#allocation6], 128, 128, 8
    $region9: #{tpu_custom_call.1} parent=1 // pred_fallthru
      _
    // Predicated region
    $region10: #{tpu_custom_call.1} parent=1 // pred_check
      _
    $region11: #{tpu_custom_call.1} parent=1 // pred_check_branch
      %35 = sbr.rel (0) target = $region13
    $region12: #{tpu_custom_call.1} parent=1 // pred_region
      %36 = dma.done [#allocation3], 512
    $region13: #{tpu_custom_call.1} parent=1 // pred_fallthru
      _
    // Predicated region
    $region14: #{tpu_custom_call.1} parent=1 // pred_check
      _
    $region15: #{tpu_custom_call.1} parent=1 // pred_check_branch
      %38 = sbr.rel (0) target = $region17
    $region16: #{tpu_custom_call.1} parent=1 // pred_region
      %39 = dma.done [#allocation6], 1024
    $region17: #{tpu_custom_call.1} parent=1 // pred_fallthru
      _
    %v40 = vld [vmem:[#allocation2] sm:$0xff]
    %v41 = vld [vmem:[#allocation2 + $0x8] sm:$0xff]
    %v42 = vld [vmem:[#allocation2 + $0x10] sm:$0xff]
    %v43 = vld [vmem:[#allocation2 + $0x18] sm:$0xff]
    %v44 = vld [vmem:[#allocation5] sm:$0xff]
    %v45 = vld [vmem:[#allocation5 + $0x8] sm:$0xff]
    %v46 = vld [vmem:[#allocation5 + $0x10] sm:$0xff]
    %v47 = vld [vmem:[#allocation5 + $0x18] sm:$0xff]
    %v48 = vmul.f32 %v40, %v44
    %v49 = vmul.f32 %v41, %v45
    %v50 = vmul.f32 %v42, %v46
    %v51 = vmul.f32 %v43, %v47
    %v52 = vadd.f32 %v48, %v49
    %v53 = vadd.f32 %v52, %v50
    %v54 = vadd.f32 %v53, %v51
    %v55 = vrot.slane %v54, 4
    %v56 = vadd.f32 %v54, %v55
    %v57 = vrot.slane %v56, 2
    %v58 = vadd.f32 %v56, %v57
    %v59 = vrot.slane %v58, 1
    %v60 = vadd.f32 %v58, %v59
    %61 = vst [vmem:[#allocation7] sm:$0x1] %v60
    %v62 = vld [vmem:[#allocation5 + $0x20] sm:$0xff]
    %v63 = vld [vmem:[#allocation5 + $0x28] sm:$0xff]
    %v64 = vld [vmem:[#allocation5 + $0x30] sm:$0xff]
    %v65 = vld [vmem:[#allocation5 + $0x38] sm:$0xff]
    %v66 = vmul.f32 %v40, %v62
    %v67 = vmul.f32 %v41, %v63
    %v68 = vmul.f32 %v42, %v64
    %v69 = vmul.f32 %v43, %v65
    %v70 = vadd.f32 %v66, %v67
    %v71 = vadd.f32 %v70, %v68
    %v72 = vadd.f32 %v71, %v69
    %v73 = vrot.slane %v72, 4
    %v74 = vadd.f32 %v72, %v73
    %v75 = vrot.slane %v74, 2
    %v76 = vadd.f32 %v74, %v75
    %v77 = vrot.slane %v76, 1
    %v78 = vadd.f32 %v76, %v77
    %79 = vst [vmem:[#allocation7 + $0x1] sm:$0x1] %v78
    // Predicated region
    $region18: #{tpu_custom_call.1} parent=1 // pred_check
      _
    $region19: #{tpu_custom_call.1} parent=1 // pred_check_branch
      %81 = sbr.rel (0) target = $region21
    $region20: #{tpu_custom_call.1} parent=1 // pred_region
      %s83 = ssub.s32 32, 32
      %84 = vsyncadd [#allocation4], %s83
      %s86 = sshll.u32 [#allocation7], 4
      %s87 = int_to_ptr.vmem [resolvable:$true] %s86
      %89 = dma.vmem_to_hbm [thread:$0]  %s87, 32, %s2, [#allocation4]
    $region21: #{tpu_custom_call.1} parent=1 // pred_fallthru
      _
    // Predicated region
    $region22: #{tpu_custom_call.1} parent=1 // pred_check
      _
    $region23: #{tpu_custom_call.1} parent=1 // pred_check_branch
      %91 = sbr.rel (0) target = $region25
    $region24: #{tpu_custom_call.1} parent=1 // pred_region
      %92 = dma.done [#allocation4], 32
    $region25: #{tpu_custom_call.1} parent=1 // pred_fallthru
      _
    %93 = vsyncpa [#allocation3], 1
    %94 = vsyncpa [#allocation6], 1
    %95 = vsyncpa [#allocation4], 1

</llo_original>
